<compile_context>
chip_gen: v7x
topology: tpu7x:2x2x1
jax: 0.10.0
libtpu: 0.0.40
codegen_flags: <defaults>
</compile_context>

<pallas_src>
import functools

import jax
import jax.numpy as jnp
from jax import lax
from jax.experimental import pallas as pl
from jax.experimental.pallas import tpu as pltpu


def lstm_kernel(x_ref, p_ref, out_ref):
    seq_len, input_size = x_ref.shape
    four_h = p_ref.shape[1]
    H = four_h // 4

    # Static row offsets into the packed parameter block.
    r_wih = 0
    r_b = input_size
    r_whh = input_size + 1
    r_wlin = r_whh + H
    r_blin = r_wlin + 1

    wih = p_ref[r_wih:r_wih + input_size, :]   # (input_size, 4H)
    b = p_ref[r_b:r_b + 1, :]                  # (1, 4H)  == b_ih + b_hh
    whh = p_ref[r_whh:r_whh + H, :]            # (H, 4H)  read once, loop-invariant

    # ---- hoisted out of the recurrence -------------------------------------
    # Input projection + fused bias for ALL timesteps at once: (seq_len, 4H).
    if input_size == 1:
        # VPU outer product (S,1)*(1,4H) -> one (8,128) vreg; avoids a
        # degenerate K=1 MXU pass + operand relayout on the prologue.
        gx = x_ref[...] * wih + b
    else:
        gx = jnp.dot(x_ref[...], wih, preferred_element_type=jnp.float32) + b

    # Lane mask selecting the "g" (tanh) gate lanes, plus the lane scale that
    # implements sigmoid via the exact identity sigmoid(x) = 0.5*tanh(x/2)+0.5.
    lane = lax.broadcasted_iota(jnp.int32, (1, four_h), 1)
    is_g = (lane >= 2 * H) & (lane < 3 * H)
    scale = jnp.where(is_g, 1.0, 0.5).astype(jnp.float32)

    # h / c carried in registers; loop fully unrolled (seq_len is static & tiny),
    # giving the LLO scheduler cross-step visibility to hide MXU/EUP latency.
    # TODO(synk): switch to lax.fori_loop(..., unroll=8) with gx staged in VMEM
    # scratch if seq_len ever grows beyond a few dozen (vreg live-range pressure).
    h = jnp.zeros((1, H), jnp.float32)
    c = jnp.zeros((1, H), jnp.float32)

    for t in range(seq_len):
        # whh is loop-invariant: the MXU RHS stays staged across the unrolled
        # steps, so each step is a 1-row LHS pass + result pop.
        gates = gx[t:t + 1, :] + jnp.dot(h, whh,
                                         preferred_element_type=jnp.float32)
        # Single EUP op per step for all four gates.
        th = jnp.tanh(gates * scale)
        act = jnp.where(is_g, th, 0.5 * th + 0.5)
        i_g = act[:, 0 * H:1 * H]
        f_g = act[:, 1 * H:2 * H]
        g_g = act[:, 2 * H:3 * H]
        o_g = act[:, 3 * H:4 * H]
        c = f_g * c + i_g * g_g
        h = o_g * jnp.tanh(c)

    # Final Linear (out_features == 1) == predictions[-1]:
    # VPU multiply + lane reduce instead of a trailing N=1 MXU pass.
    wlin = p_ref[r_wlin:r_wlin + 1, 0:H]       # (1, H)
    blin = p_ref[r_blin:r_blin + 1, 0:1]       # (1, 1)
    out_ref[...] = jnp.sum(h * wlin, axis=1, keepdims=True) + blin


def pack_lstm_params(w_ih, w_hh, b_ih, b_hh, w_lin, b_lin):
    """One-time (model-init) host-side packing of all parameters into a single
    lane-dense f32 block of shape (rows, 4H). Call once; reuse per forward."""
    four_h, input_size = w_ih.shape
    H = four_h // 4
    out_features = w_lin.shape[0]
    assert out_features == 1, "kernel folds the final Linear as a lane reduce"

    wih_t = jnp.asarray(w_ih, jnp.float32).T                        # (input_size, 4H)
    b = (jnp.asarray(b_ih, jnp.float32)
         + jnp.asarray(b_hh, jnp.float32)).reshape(1, four_h)       # (1, 4H)
    whh_t = jnp.asarray(w_hh, jnp.float32).T                        # (H, 4H)
    wlin_row = jnp.zeros((1, four_h), jnp.float32).at[0, :H].set(
        jnp.asarray(w_lin, jnp.float32)[0])                         # (1, 4H), padded
    blin_row = jnp.zeros((1, four_h), jnp.float32).at[0, 0].set(
        jnp.asarray(b_lin, jnp.float32)[0])                         # (1, 4H), padded

    packed = jnp.concatenate([wih_t, b, whh_t, wlin_row, blin_row], axis=0)
    pad = (-packed.shape[0]) % 8                                    # sublane align
    if pad:
        packed = jnp.concatenate(
            [packed, jnp.zeros((pad, four_h), jnp.float32)], axis=0)
    return packed


@jax.jit
def lstm_forward(x, packed):
    """x: (seq_len, input_size) f32; packed: output of pack_lstm_params.
    Returns predictions[-1] of shape (1,)."""
    out = pl.pallas_call(
        lstm_kernel,
        out_shape=jax.ShapeDtypeStruct((1, 1), jnp.float32),
        in_specs=[pl.BlockSpec(memory_space=pltpu.MemorySpace.VMEM),
                  pl.BlockSpec(memory_space=pltpu.MemorySpace.VMEM)],
        out_specs=pl.BlockSpec(memory_space=pltpu.MemorySpace.VMEM),
    )(jnp.asarray(x, jnp.float32), packed)
    # TODO(synk): if multiple independent sequences are available, batch them
    # into the M dim of the recurrence matmul and (on v7x) shard a batch grid
    # axis across the 2 TensorCores with dimension_semantics=("parallel",).
    return out[0]                                                   # (1,)


def lstm_reference(x, w_ih, w_hh, b_ih, b_hh, w_lin, b_lin):
    """Pure-JAX reference mirroring torch.nn.LSTM + Linear, returns preds[-1]."""
    H = w_hh.shape[1]
    h = jnp.zeros((H,), jnp.float32)
    c = jnp.zeros((H,), jnp.float32)

    def step(carry, x_t):
        h, c = carry
        gates = w_ih @ x_t + b_ih + w_hh @ h + b_hh
        i = jax.nn.sigmoid(gates[0 * H:1 * H])
        f = jax.nn.sigmoid(gates[1 * H:2 * H])
        g = jnp.tanh(gates[2 * H:3 * H])
        o = jax.nn.sigmoid(gates[3 * H:4 * H])
        c = f * c + i * g
        h = o * jnp.tanh(c)
        return (h, c), h

    (h, c), _ = lax.scan(step, (h, c), x)
    return w_lin @ h + b_lin


if __name__ == "__main__":
    # Small shapes consistent with the module's forward: seq=8, input_size=1,
    # hidden=32 (4H = 128 = one vreg lane width), out_features=1.
    seq_len, input_size, hidden, out_features = 8, 1, 32, 1

    key = jax.random.PRNGKey(0)
    ks = jax.random.split(key, 8)
    bound = 1.0 / jnp.sqrt(hidden)  # mimic PyTorch's uniform(-1/sqrt(H), 1/sqrt(H))

    x = jax.random.normal(ks[0], (seq_len, input_size), jnp.float32)
    w_ih = jax.random.uniform(ks[1], (4 * hidden, input_size), jnp.float32, -bound, bound)
    w_hh = jax.random.uniform(ks[2], (4 * hidden, hidden), jnp.float32, -bound, bound)
    b_ih = jax.random.uniform(ks[3], (4 * hidden,), jnp.float32, -bound, bound)
    b_hh = jax.random.uniform(ks[4], (4 * hidden,), jnp.float32, -bound, bound)
    w_lin = jax.random.uniform(ks[5], (out_features, hidden), jnp.float32, -bound, bound)
    b_lin = jax.random.uniform(ks[6], (out_features,), jnp.float32, -bound, bound)

    packed = pack_lstm_params(w_ih, w_hh, b_ih, b_hh, w_lin, b_lin)  # once, at init

    pred = lstm_forward(x, packed)
    pred = jax.block_until_ready(pred)

    ref = lstm_reference(x, w_ih, w_hh, b_ih, b_hh, w_lin, b_lin)
    assert pred.shape == (out_features,)
    assert jnp.allclose(pred, ref, atol=1e-5, rtol=1e-5), (pred, ref)

    print("KERNEL_OK")
</pallas_src>

<mosaic_0001>
module attributes {stable_mosaic.version = 11 : i64} {
  func.func @lstm_kernel(%arg0: memref<8x1xf32, #tpu.memory_space<vmem>>, %arg1: memref<40x128xf32, #tpu.memory_space<vmem>>, %arg2: memref<1x1xf32, #tpu.memory_space<vmem>>) attributes {dimension_semantics = [], scalar_prefetch = 0 : i64, scratch_operands = 0 : i64, tpu.core_type = #tpu.core_type<tc>} {
    %c0 = arith.constant 0 : index
    %c0_0 = arith.constant 0 : index
    %0 = vector.load %arg1[%c0, %c0_0] : memref<40x128xf32, #tpu.memory_space<vmem>>, vector<1x128xf32>
    %c1 = arith.constant 1 : index
    %c0_1 = arith.constant 0 : index
    %1 = vector.load %arg1[%c1, %c0_1] : memref<40x128xf32, #tpu.memory_space<vmem>>, vector<1x128xf32>
    %c2 = arith.constant 2 : index
    %c0_2 = arith.constant 0 : index
    %2 = vector.load %arg1[%c2, %c0_2] : memref<40x128xf32, #tpu.memory_space<vmem>>, vector<32x128xf32>
    %c0_3 = arith.constant 0 : index
    %c0_4 = arith.constant 0 : index
    %3 = vector.load %arg0[%c0_3, %c0_4] : memref<8x1xf32, #tpu.memory_space<vmem>>, vector<8x1xf32>
    %4 = vector.broadcast %3 : vector<8x1xf32> to vector<8x128xf32>
    %5 = vector.broadcast %0 : vector<1x128xf32> to vector<8x128xf32>
    %6 = arith.mulf %4, %5 : vector<8x128xf32>
    %7 = vector.broadcast %1 : vector<1x128xf32> to vector<8x128xf32>
    %8 = arith.addf %6, %7 : vector<8x128xf32>
    %9 = tpu.iota {dimensions = array<i32: 1>} : vector<1x128xi32>
    %c64_i32 = arith.constant 64 : i32
    %10 = vector.broadcast %c64_i32 : i32 to vector<1x128xi32>
    %11 = arith.cmpi sge, %9, %10 : vector<1x128xi32>
    %c96_i32 = arith.constant 96 : i32
    %12 = vector.broadcast %c96_i32 : i32 to vector<1x128xi32>
    %13 = arith.cmpi slt, %9, %12 : vector<1x128xi32>
    %14 = arith.andi %11, %13 : vector<1x128xi1>
    %cst = arith.constant 1.000000e+00 : f32
    %cst_5 = arith.constant 5.000000e-01 : f32
    %15 = vector.broadcast %cst : f32 to vector<1x128xf32>
    %16 = vector.broadcast %cst_5 : f32 to vector<1x128xf32>
    %17 = arith.select %14, %15, %16 : vector<1x128xi1>, vector<1x128xf32>
    %cst_6 = arith.constant 0.000000e+00 : f32
    %18 = vector.broadcast %cst_6 : f32 to vector<1x32xf32>
    %cst_7 = arith.constant 0.000000e+00 : f32
    %19 = vector.broadcast %cst_7 : f32 to vector<1x32xf32>
    %20 = vector.extract_strided_slice %8 {offsets = [0, 0], sizes = [1, 128], strides = [1, 1]} : vector<8x128xf32> to vector<1x128xf32>
    %cst_8 = arith.constant dense<0.000000e+00> : vector<1x128xf32>
    %21 = tpu.matmul %18, %2, %cst_8 {dimension_numbers = #tpu.dot_dimension_numbers<[1], [0], [0], [1], [0, 0, 1, 1], [], []>} : vector<1x32xf32>, vector<32x128xf32>, vector<1x128xf32> -> vector<1x128xf32>
    %22 = arith.addf %20, %21 : vector<1x128xf32>
    %23 = arith.mulf %22, %17 : vector<1x128xf32>
    %24 = math.tanh %23 : vector<1x128xf32>
    %cst_9 = arith.constant 5.000000e-01 : f32
    %25 = vector.broadcast %cst_9 : f32 to vector<1x128xf32>
    %26 = arith.mulf %25, %24 : vector<1x128xf32>
    %cst_10 = arith.constant 5.000000e-01 : f32
    %27 = vector.broadcast %cst_10 : f32 to vector<1x128xf32>
    %28 = arith.addf %26, %27 : vector<1x128xf32>
    %29 = arith.select %14, %24, %28 : vector<1x128xi1>, vector<1x128xf32>
    %30 = vector.extract_strided_slice %29 {offsets = [0, 0], sizes = [1, 32], strides = [1, 1]} : vector<1x128xf32> to vector<1x32xf32>
    %31 = vector.extract_strided_slice %29 {offsets = [0, 32], sizes = [1, 32], strides = [1, 1]} : vector<1x128xf32> to vector<1x32xf32>
    %32 = vector.extract_strided_slice %29 {offsets = [0, 64], sizes = [1, 32], strides = [1, 1]} : vector<1x128xf32> to vector<1x32xf32>
    %33 = vector.extract_strided_slice %29 {offsets = [0, 96], sizes = [1, 32], strides = [1, 1]} : vector<1x128xf32> to vector<1x32xf32>
    %34 = arith.mulf %31, %19 : vector<1x32xf32>
    %35 = arith.mulf %30, %32 : vector<1x32xf32>
    %36 = arith.addf %34, %35 : vector<1x32xf32>
    %37 = math.tanh %36 : vector<1x32xf32>
    %38 = arith.mulf %33, %37 : vector<1x32xf32>
    %39 = vector.extract_strided_slice %8 {offsets = [1, 0], sizes = [1, 128], strides = [1, 1]} : vector<8x128xf32> to vector<1x128xf32>
    %cst_11 = arith.constant dense<0.000000e+00> : vector<1x128xf32>
    %40 = tpu.matmul %38, %2, %cst_11 {dimension_numbers = #tpu.dot_dimension_numbers<[1], [0], [0], [1], [0, 0, 1, 1], [], []>} : vector<1x32xf32>, vector<32x128xf32>, vector<1x128xf32> -> vector<1x128xf32>
    %41 = arith.addf %39, %40 : vector<1x128xf32>
    %42 = arith.mulf %41, %17 : vector<1x128xf32>
    %43 = math.tanh %42 : vector<1x128xf32>
    %cst_12 = arith.constant 5.000000e-01 : f32
    %44 = vector.broadcast %cst_12 : f32 to vector<1x128xf32>
    %45 = arith.mulf %44, %43 : vector<1x128xf32>
    %cst_13 = arith.constant 5.000000e-01 : f32
    %46 = vector.broadcast %cst_13 : f32 to vector<1x128xf32>
    %47 = arith.addf %45, %46 : vector<1x128xf32>
    %48 = arith.select %14, %43, %47 : vector<1x128xi1>, vector<1x128xf32>
    %49 = vector.extract_strided_slice %48 {offsets = [0, 0], sizes = [1, 32], strides = [1, 1]} : vector<1x128xf32> to vector<1x32xf32>
    %50 = vector.extract_strided_slice %48 {offsets = [0, 32], sizes = [1, 32], strides = [1, 1]} : vector<1x128xf32> to vector<1x32xf32>
    %51 = vector.extract_strided_slice %48 {offsets = [0, 64], sizes = [1, 32], strides = [1, 1]} : vector<1x128xf32> to vector<1x32xf32>
    %52 = vector.extract_strided_slice %48 {offsets = [0, 96], sizes = [1, 32], strides = [1, 1]} : vector<1x128xf32> to vector<1x32xf32>
    %53 = arith.mulf %50, %36 : vector<1x32xf32>
    %54 = arith.mulf %49, %51 : vector<1x32xf32>
    %55 = arith.addf %53, %54 : vector<1x32xf32>
    %56 = math.tanh %55 : vector<1x32xf32>
    %57 = arith.mulf %52, %56 : vector<1x32xf32>
    %58 = vector.extract_strided_slice %8 {offsets = [2, 0], sizes = [1, 128], strides = [1, 1]} : vector<8x128xf32> to vector<1x128xf32>
    %cst_14 = arith.constant dense<0.000000e+00> : vector<1x128xf32>
    %59 = tpu.matmul %57, %2, %cst_14 {dimension_numbers = #tpu.dot_dimension_numbers<[1], [0], [0], [1], [0, 0, 1, 1], [], []>} : vector<1x32xf32>, vector<32x128xf32>, vector<1x128xf32> -> vector<1x128xf32>
    %60 = arith.addf %58, %59 : vector<1x128xf32>
    %61 = arith.mulf %60, %17 : vector<1x128xf32>
    %62 = math.tanh %61 : vector<1x128xf32>
    %cst_15 = arith.constant 5.000000e-01 : f32
    %63 = vector.broadcast %cst_15 : f32 to vector<1x128xf32>
    %64 = arith.mulf %63, %62 : vector<1x128xf32>
    %cst_16 = arith.constant 5.000000e-01 : f32
    %65 = vector.broadcast %cst_16 : f32 to vector<1x128xf32>
    %66 = arith.addf %64, %65 : vector<1x128xf32>
    %67 = arith.select %14, %62, %66 : vector<1x128xi1>, vector<1x128xf32>
    %68 = vector.extract_strided_slice %67 {offsets = [0, 0], sizes = [1, 32], strides = [1, 1]} : vector<1x128xf32> to vector<1x32xf32>
    %69 = vector.extract_strided_slice %67 {offsets = [0, 32], sizes = [1, 32], strides = [1, 1]} : vector<1x128xf32> to vector<1x32xf32>
    %70 = vector.extract_strided_slice %67 {offsets = [0, 64], sizes = [1, 32], strides = [1, 1]} : vector<1x128xf32> to vector<1x32xf32>
    %71 = vector.extract_strided_slice %67 {offsets = [0, 96], sizes = [1, 32], strides = [1, 1]} : vector<1x128xf32> to vector<1x32xf32>
    %72 = arith.mulf %69, %55 : vector<1x32xf32>
    %73 = arith.mulf %68, %70 : vector<1x32xf32>
    %74 = arith.addf %72, %73 : vector<1x32xf32>
    %75 = math.tanh %74 : vector<1x32xf32>
    %76 = arith.mulf %71, %75 : vector<1x32xf32>
    %77 = vector.extract_strided_slice %8 {offsets = [3, 0], sizes = [1, 128], strides = [1, 1]} : vector<8x128xf32> to vector<1x128xf32>
    %cst_17 = arith.constant dense<0.000000e+00> : vector<1x128xf32>
    %78 = tpu.matmul %76, %2, %cst_17 {dimension_numbers = #tpu.dot_dimension_numbers<[1], [0], [0], [1], [0, 0, 1, 1], [], []>} : vector<1x32xf32>, vector<32x128xf32>, vector<1x128xf32> -> vector<1x128xf32>
    %79 = arith.addf %77, %78 : vector<1x128xf32>
    %80 = arith.mulf %79, %17 : vector<1x128xf32>
    %81 = math.tanh %80 : vector<1x128xf32>
    %cst_18 = arith.constant 5.000000e-01 : f32
    %82 = vector.broadcast %cst_18 : f32 to vector<1x128xf32>
    %83 = arith.mulf %82, %81 : vector<1x128xf32>
    %cst_19 = arith.constant 5.000000e-01 : f32
    %84 = vector.broadcast %cst_19 : f32 to vector<1x128xf32>
    %85 = arith.addf %83, %84 : vector<1x128xf32>
    %86 = arith.select %14, %81, %85 : vector<1x128xi1>, vector<1x128xf32>
    %87 = vector.extract_strided_slice %86 {offsets = [0, 0], sizes = [1, 32], strides = [1, 1]} : vector<1x128xf32> to vector<1x32xf32>
    %88 = vector.extract_strided_slice %86 {offsets = [0, 32], sizes = [1, 32], strides = [1, 1]} : vector<1x128xf32> to vector<1x32xf32>
    %89 = vector.extract_strided_slice %86 {offsets = [0, 64], sizes = [1, 32], strides = [1, 1]} : vector<1x128xf32> to vector<1x32xf32>
    %90 = vector.extract_strided_slice %86 {offsets = [0, 96], sizes = [1, 32], strides = [1, 1]} : vector<1x128xf32> to vector<1x32xf32>
    %91 = arith.mulf %88, %74 : vector<1x32xf32>
    %92 = arith.mulf %87, %89 : vector<1x32xf32>
    %93 = arith.addf %91, %92 : vector<1x32xf32>
    %94 = math.tanh %93 : vector<1x32xf32>
    %95 = arith.mulf %90, %94 : vector<1x32xf32>
    %96 = vector.extract_strided_slice %8 {offsets = [4, 0], sizes = [1, 128], strides = [1, 1]} : vector<8x128xf32> to vector<1x128xf32>
    %cst_20 = arith.constant dense<0.000000e+00> : vector<1x128xf32>
    %97 = tpu.matmul %95, %2, %cst_20 {dimension_numbers = #tpu.dot_dimension_numbers<[1], [0], [0], [1], [0, 0, 1, 1], [], []>} : vector<1x32xf32>, vector<32x128xf32>, vector<1x128xf32> -> vector<1x128xf32>
    %98 = arith.addf %96, %97 : vector<1x128xf32>
    %99 = arith.mulf %98, %17 : vector<1x128xf32>
    %100 = math.tanh %99 : vector<1x128xf32>
    %cst_21 = arith.constant 5.000000e-01 : f32
    %101 = vector.broadcast %cst_21 : f32 to vector<1x128xf32>
    %102 = arith.mulf %101, %100 : vector<1x128xf32>
    %cst_22 = arith.constant 5.000000e-01 : f32
    %103 = vector.broadcast %cst_22 : f32 to vector<1x128xf32>
    %104 = arith.addf %102, %103 : vector<1x128xf32>
    %105 = arith.select %14, %100, %104 : vector<1x128xi1>, vector<1x128xf32>
    %106 = vector.extract_strided_slice %105 {offsets = [0, 0], sizes = [1, 32], strides = [1, 1]} : vector<1x128xf32> to vector<1x32xf32>
    %107 = vector.extract_strided_slice %105 {offsets = [0, 32], sizes = [1, 32], strides = [1, 1]} : vector<1x128xf32> to vector<1x32xf32>
    %108 = vector.extract_strided_slice %105 {offsets = [0, 64], sizes = [1, 32], strides = [1, 1]} : vector<1x128xf32> to vector<1x32xf32>
    %109 = vector.extract_strided_slice %105 {offsets = [0, 96], sizes = [1, 32], strides = [1, 1]} : vector<1x128xf32> to vector<1x32xf32>
    %110 = arith.mulf %107, %93 : vector<1x32xf32>
    %111 = arith.mulf %106, %108 : vector<1x32xf32>
    %112 = arith.addf %110, %111 : vector<1x32xf32>
    %113 = math.tanh %112 : vector<1x32xf32>
    %114 = arith.mulf %109, %113 : vector<1x32xf32>
    %115 = vector.extract_strided_slice %8 {offsets = [5, 0], sizes = [1, 128], strides = [1, 1]} : vector<8x128xf32> to vector<1x128xf32>
    %cst_23 = arith.constant dense<0.000000e+00> : vector<1x128xf32>
    %116 = tpu.matmul %114, %2, %cst_23 {dimension_numbers = #tpu.dot_dimension_numbers<[1], [0], [0], [1], [0, 0, 1, 1], [], []>} : vector<1x32xf32>, vector<32x128xf32>, vector<1x128xf32> -> vector<1x128xf32>
    %117 = arith.addf %115, %116 : vector<1x128xf32>
    %118 = arith.mulf %117, %17 : vector<1x128xf32>
    %119 = math.tanh %118 : vector<1x128xf32>
    %cst_24 = arith.constant 5.000000e-01 : f32
    %120 = vector.broadcast %cst_24 : f32 to vector<1x128xf32>
    %121 = arith.mulf %120, %119 : vector<1x128xf32>
    %cst_25 = arith.constant 5.000000e-01 : f32
    %122 = vector.broadcast %cst_25 : f32 to vector<1x128xf32>
    %123 = arith.addf %121, %122 : vector<1x128xf32>
    %124 = arith.select %14, %119, %123 : vector<1x128xi1>, vector<1x128xf32>
    %125 = vector.extract_strided_slice %124 {offsets = [0, 0], sizes = [1, 32], strides = [1, 1]} : vector<1x128xf32> to vector<1x32xf32>
    %126 = vector.extract_strided_slice %124 {offsets = [0, 32], sizes = [1, 32], strides = [1, 1]} : vector<1x128xf32> to vector<1x32xf32>
    %127 = vector.extract_strided_slice %124 {offsets = [0, 64], sizes = [1, 32], strides = [1, 1]} : vector<1x128xf32> to vector<1x32xf32>
    %128 = vector.extract_strided_slice %124 {offsets = [0, 96], sizes = [1, 32], strides = [1, 1]} : vector<1x128xf32> to vector<1x32xf32>
    %129 = arith.mulf %126, %112 : vector<1x32xf32>
    %130 = arith.mulf %125, %127 : vector<1x32xf32>
    %131 = arith.addf %129, %130 : vector<1x32xf32>
    %132 = math.tanh %131 : vector<1x32xf32>
    %133 = arith.mulf %128, %132 : vector<1x32xf32>
    %134 = vector.extract_strided_slice %8 {offsets = [6, 0], sizes = [1, 128], strides = [1, 1]} : vector<8x128xf32> to vector<1x128xf32>
    %cst_26 = arith.constant dense<0.000000e+00> : vector<1x128xf32>
    %135 = tpu.matmul %133, %2, %cst_26 {dimension_numbers = #tpu.dot_dimension_numbers<[1], [0], [0], [1], [0, 0, 1, 1], [], []>} : vector<1x32xf32>, vector<32x128xf32>, vector<1x128xf32> -> vector<1x128xf32>
    %136 = arith.addf %134, %135 : vector<1x128xf32>
    %137 = arith.mulf %136, %17 : vector<1x128xf32>
    %138 = math.tanh %137 : vector<1x128xf32>
    %cst_27 = arith.constant 5.000000e-01 : f32
    %139 = vector.broadcast %cst_27 : f32 to vector<1x128xf32>
    %140 = arith.mulf %139, %138 : vector<1x128xf32>
    %cst_28 = arith.constant 5.000000e-01 : f32
    %141 = vector.broadcast %cst_28 : f32 to vector<1x128xf32>
    %142 = arith.addf %140, %141 : vector<1x128xf32>
    %143 = arith.select %14, %138, %142 : vector<1x128xi1>, vector<1x128xf32>
    %144 = vector.extract_strided_slice %143 {offsets = [0, 0], sizes = [1, 32], strides = [1, 1]} : vector<1x128xf32> to vector<1x32xf32>
    %145 = vector.extract_strided_slice %143 {offsets = [0, 32], sizes = [1, 32], strides = [1, 1]} : vector<1x128xf32> to vector<1x32xf32>
    %146 = vector.extract_strided_slice %143 {offsets = [0, 64], sizes = [1, 32], strides = [1, 1]} : vector<1x128xf32> to vector<1x32xf32>
    %147 = vector.extract_strided_slice %143 {offsets = [0, 96], sizes = [1, 32], strides = [1, 1]} : vector<1x128xf32> to vector<1x32xf32>
    %148 = arith.mulf %145, %131 : vector<1x32xf32>
    %149 = arith.mulf %144, %146 : vector<1x32xf32>
    %150 = arith.addf %148, %149 : vector<1x32xf32>
    %151 = math.tanh %150 : vector<1x32xf32>
    %152 = arith.mulf %147, %151 : vector<1x32xf32>
    %153 = vector.extract_strided_slice %8 {offsets = [7, 0], sizes = [1, 128], strides = [1, 1]} : vector<8x128xf32> to vector<1x128xf32>
    %cst_29 = arith.constant dense<0.000000e+00> : vector<1x128xf32>
    %154 = tpu.matmul %152, %2, %cst_29 {dimension_numbers = #tpu.dot_dimension_numbers<[1], [0], [0], [1], [0, 0, 1, 1], [], []>} : vector<1x32xf32>, vector<32x128xf32>, vector<1x128xf32> -> vector<1x128xf32>
    %155 = arith.addf %153, %154 : vector<1x128xf32>
    %156 = arith.mulf %155, %17 : vector<1x128xf32>
    %157 = math.tanh %156 : vector<1x128xf32>
    %cst_30 = arith.constant 5.000000e-01 : f32
    %158 = vector.broadcast %cst_30 : f32 to vector<1x128xf32>
    %159 = arith.mulf %158, %157 : vector<1x128xf32>
    %cst_31 = arith.constant 5.000000e-01 : f32
    %160 = vector.broadcast %cst_31 : f32 to vector<1x128xf32>
    %161 = arith.addf %159, %160 : vector<1x128xf32>
    %162 = arith.select %14, %157, %161 : vector<1x128xi1>, vector<1x128xf32>
    %163 = vector.extract_strided_slice %162 {offsets = [0, 0], sizes = [1, 32], strides = [1, 1]} : vector<1x128xf32> to vector<1x32xf32>
    %164 = vector.extract_strided_slice %162 {offsets = [0, 32], sizes = [1, 32], strides = [1, 1]} : vector<1x128xf32> to vector<1x32xf32>
    %165 = vector.extract_strided_slice %162 {offsets = [0, 64], sizes = [1, 32], strides = [1, 1]} : vector<1x128xf32> to vector<1x32xf32>
    %166 = vector.extract_strided_slice %162 {offsets = [0, 96], sizes = [1, 32], strides = [1, 1]} : vector<1x128xf32> to vector<1x32xf32>
    %167 = arith.mulf %164, %150 : vector<1x32xf32>
    %168 = arith.mulf %163, %165 : vector<1x32xf32>
    %169 = arith.addf %167, %168 : vector<1x32xf32>
    %170 = math.tanh %169 : vector<1x32xf32>
    %171 = arith.mulf %166, %170 : vector<1x32xf32>
    %c34 = arith.constant 34 : index
    %c0_32 = arith.constant 0 : index
    %172 = vector.load %arg1[%c34, %c0_32] : memref<40x128xf32, #tpu.memory_space<vmem>>, vector<1x32xf32>
    %c35 = arith.constant 35 : index
    %c0_33 = arith.constant 0 : index
    %173 = vector.load %arg1[%c35, %c0_33] : memref<40x128xf32, #tpu.memory_space<vmem>>, vector<1x1xf32>
    %174 = arith.mulf %171, %172 : vector<1x32xf32>
    %cst_34 = arith.constant dense<0.000000e+00> : vector<1xf32>
    %175 = vector.multi_reduction <add>, %174, %cst_34 [1] : vector<1x32xf32> to vector<1xf32>
    %176 = vector.shape_cast %175 : vector<1xf32> to vector<1x1xf32>
    %177 = arith.addf %176, %173 : vector<1x1xf32>
    %c0_35 = arith.constant 0 : index
    %c0_36 = arith.constant 0 : index
    %178 = vector.load %arg2[%c0_35, %c0_36] : memref<1x1xf32, #tpu.memory_space<vmem>>, vector<1x1xf32>
    tpu.vector_store %arg2[%c0_35, %c0_36], %177 {strides = array<i32>} : memref<1x1xf32, #tpu.memory_space<vmem>>, vector<1x1xf32>,
    return
  }
}

</mosaic_0001>

<llo_original>
// kernel: lstm_forward.1
$region0: #{lstm_forward.1}
  #allocation0 [shape = 'u32[]', space=smem, size = 0x4, offset = 0x4, fixed_abs, tag = 'smem constant byte address 0x4 - core index']
  #allocation1 [shape = 'u32[144,128]{1,0:T(1,128)}', space=vmem, size = 0x12000, scoped, tag = 'internal scratch']
  %s0 = inlined_call_operand.vmem [shape: f32[8,1], index: 0, kind: input, shape index: {}]
  %s1 = inlined_call_operand.hbm [shape: f32[40,128], index: 1, kind: input, shape index: {}]
  %s2 = inlined_call_operand.hbm [shape: f32[1,1], index: 2, kind: output, shape index: {}]
  %s3 = sld [smem:[#allocation0]]
  $region22: #{lstm_forward.1} parent=0
    _
  %s5 = ssub.s32 1, %s3
  %s6 = scalar_select 0, %s5, %s3
  $region1: #{lstm_forward.1} parent=0
    #allocation2 [shape = 'u8[20480]{0}', space=vmem, size = 0x5000, scoped, tag = 'input window, operand 1, single buffered']
    #allocation3 [shape = 's32[1]{0}', space=sflag, size = 0x4, scoped, tag = 'scoped memory for lstm_forward.1']
    #allocation4 [shape = 's32[1]{0}', space=sflag, size = 0x4, scoped, tag = 'scoped memory for lstm_forward.1']
    #allocation5 [shape = 'u8[512]{0}', space=vmem, size = 0x400, scoped, tag = 'output window, operand 0, single buffered']
    %7 = vsyncpa [#allocation3], 0
    %8 = vsyncpa [#allocation4], 0
    // Predicated region
    $region2: #{lstm_forward.1} parent=1 // pred_check
      _
    $region3: #{lstm_forward.1} parent=1 // pred_check_branch
      %10 = sbr.rel (0) target = $region5
    $region4: #{lstm_forward.1} parent=1 // pred_region
      _
    $region5: #{lstm_forward.1} parent=1 // pred_fallthru
      _
    // Predicated region
    $region6: #{lstm_forward.1} parent=1 // pred_check
      _
    $region7: #{lstm_forward.1} parent=1 // pred_check_branch
      %12 = sbr.rel (0) target = $region9
    $region8: #{lstm_forward.1} parent=1 // pred_region
      %s14 = ssub.s32 640, 640
      %15 = vsyncadd [#allocation3], %s14
      %s16 = sshll.u32 [#allocation2], 4
      %s17 = int_to_ptr.vmem [resolvable:$true] %s16
      %22 = dma.hbm_to_vmem [thread:$0]  %s1, 640, %s17, [#allocation3], 128, 128, 8
    $region9: #{lstm_forward.1} parent=1 // pred_fallthru
      _
    // Predicated region
    $region10: #{lstm_forward.1} parent=1 // pred_check
      _
    $region11: #{lstm_forward.1} parent=1 // pred_check_branch
      %24 = sbr.rel (0) target = $region13
    $region12: #{lstm_forward.1} parent=1 // pred_region
      %25 = dma.done [#allocation3], 640
    $region13: #{lstm_forward.1} parent=1 // pred_fallthru
      _
    %v26 = vld [vmem:[#allocation2] sm:$0x1]
    %v27 = vld [vmem:[#allocation2 + $0x1] sm:$0x1]
    %v28 = vld [vmem:[#allocation2 + $0x2] sm:$0xff]
    %v29 = vld [vmem:[#allocation2 + $0xa] sm:$0xff]
    %v30 = vld [vmem:[#allocation2 + $0x12] sm:$0xff]
    %v31 = vld [vmem:[#allocation2 + $0x1a] sm:$0xff]
    %v32 = vld [vmem:[%s0] sm:$0xff]
    %34 = vset.pattern.permute.xlu0 0
    %35 = vperm.xlu0 %34, %v32
    %v36 = vpop.permute.xlu0 %35
    %v38 = vlaneseq
    %v39 = vshrl.u32 %v38, 7
    %v40 = vsub.s32 0, %v39
    %v41 = vrot.slane %v26, %v40
    %v42 = vmul.f32 %v36, %v41
    %v43 = vlaneseq
    %v44 = vshrl.u32 %v43, 7
    %v45 = vsub.s32 0, %v44
    %v46 = vrot.slane %v27, %v45
    %v47 = vadd.f32 %v42, %v46
    %v48 = vlaneseq
    %v49 = vand.u32 %v48, 127
    %vm50 = vcmp.ge.s32.totalorder %v49, 64
    %vm51 = vcmp.lt.s32.totalorder %v49, 96
    %vm52 = vmand %vm50, %vm51
    %v53 = vsel %vm52, 1.0, 0.5
    %vm54 = vcmask 261120
    %v56 = vsel %vm54, 0.0, 0
    %58 = vmatprep.subr.mxu0 0.0
    %59 = vmatpush1.msra.mxu0 %v28
    %60 = vmatprep.subr.mxu0 0.0
    %61 = vmatpush1.msra.mxu0 %v29
    %62 = vmatprep.subr.mxu0 0.0
    %63 = vmatpush1.msra.mxu0 %v30
    %64 = vmatprep.subr.mxu0 0.0
    %65 = vmatpush1.msra.mxu0 %v31
    %66 = vmatprep.subr.mxu0 0.0
    %67 = vmatpush1.msra.mxu0 0.0
    %68 = vmatprep.subr.mxu0 0.0
    %69 = vmatpush1.msra.mxu0 0.0
    %70 = vmatprep.subr.mxu0 0.0
    %71 = vmatpush1.msra.mxu0 0.0
    %72 = vmatprep.subr.mxu0 0.0
    %73 = vmatpush1.msra.mxu0 0.0
    %74 = vmatprep.subr.mxu0 0.0
    %75 = vmatpush1.msra.mxu0 0.0
    %76 = vmatprep.subr.mxu0 0.0
    %77 = vmatpush1.msra.mxu0 0.0
    %78 = vmatprep.subr.mxu0 0.0
    %79 = vmatpush1.msra.mxu0 0.0
    %80 = vmatprep.subr.mxu0 0.0
    %81 = vmatpush1.msra.mxu0 0.0
    %82 = vmatprep.subr.mxu0 0.0
    %83 = vmatpush1.msra.mxu0 0.0
    %84 = vmatprep.subr.mxu0 0.0
    %85 = vmatpush1.msra.mxu0 0.0
    %86 = vmatprep.subr.mxu0 0.0
    %87 = vmatpush1.msra.mxu0 0.0
    %88 = vmatprep.subr.mxu0 0.0
    %89 = vmatpush1.msra.mxu0 0.0
    %90 = vmatprep.subr.mxu0 0.0
    %91 = vmatpush1.msra.mxu0 0.0
    %92 = vmatprep.subr.mxu0 0.0
    %93 = vmatpush1.msra.mxu0 0.0
    %94 = vmatprep.subr.mxu0 0.0
    %95 = vmatpush1.msra.mxu0 0.0
    %96 = vmatprep.subr.mxu0 0.0
    %97 = vmatpush1.msra.mxu0 0.0
    %98 = vmatprep.subr.mxu0 0.0
    %99 = vmatpush1.msra.mxu0 0.0
    %100 = vmatprep.subr.mxu0 0.0
    %101 = vmatpush1.msra.mxu0 0.0
    %102 = vmatprep.subr.mxu0 0.0
    %103 = vmatpush1.msra.mxu0 0.0
    %104 = vmatprep.subr.mxu0 0.0
    %105 = vmatpush1.msra.mxu0 0.0
    %106 = vmatprep.subr.mxu0 0.0
    %107 = vmatpush1.msra.mxu0 0.0
    %108 = vmatprep.subr.mxu0 0.0
    %109 = vmatpush1.msra.mxu0 0.0
    %110 = vmatprep.subr.mxu0 0.0
    %111 = vmatpush1.msra.mxu0 0.0
    %112 = vmatprep.subr.mxu0 0.0
    %113 = vmatpush1.msra.mxu0 0.0
    %114 = vmatprep.subr.mxu0 0.0
    %115 = vmatpush1.msra.mxu0 0.0
    %116 = vmatprep.subr.mxu0 0.0
    %117 = vmatpush1.msra.mxu0 0.0
    %118 = vmatprep.subr.mxu0 0.0
    %119 = vmatpush1.msra.mxu0 0.0
    %120 = vmatprep.subr.mxu0 0.0
    %121 = vmatpush1.msra.mxu0 0.0
    %122 = vmatprep.mubr.f32.mxu0 0.0
    %123 = vmatmul.mubr.f32.gmra.mrb[0].mxu0 %v56
    %v124 = vpop.f32.mrb[0].mxu0
    %v125 = vadd.f32 0.0, %v124
    %v126 = vpop.f32.mrb[0].mxu0
    %127 = vdwg.mxu0
    %v128 = vadd.f32 %v47, %v125
    %v129 = vmul.f32 %v128, %v53
    %v130 = vtanh.pop %v129
    %v131 = vmul.f32 %v130, 0.5
    %v132 = vadd.f32 %v131, 0.5
    %v133 = vsel %vm52, %v130, %v132
    %v134 = vmul.f32 %v133, 0.0
    %136 = vrot.lane.b32.xlu0 %v133, 64
    %v137 = vpop.permute.xlu0 %136
    %v139 = vmul.f32 %v133, %v137
    %141 = vrot.lane.b32.xlu0 %v139, 32
    %v142 = vpop.permute.xlu0 %141
    %v144 = vadd.f32 %v134, %v142
    %v145 = vtanh.pop %v144
    %147 = vrot.lane.b32.xlu0 %v145, 64
    %v148 = vpop.permute.xlu0 %147
    %v150 = vmul.f32 %v133, %v148
    %152 = vrot.lane.b32.xlu0 %v150, 32
    %v153 = vpop.permute.xlu0 %152
    %v154 = vsel %vm54, %v153, 0
    %156 = vmatprep.subr.mxu0 0.0
    %157 = vmatpush1.msra.mxu0 %v28
    %158 = vmatprep.subr.mxu0 0.0
    %159 = vmatpush1.msra.mxu0 %v29
    %160 = vmatprep.subr.mxu0 0.0
    %161 = vmatpush1.msra.mxu0 %v30
    %162 = vmatprep.subr.mxu0 0.0
    %163 = vmatpush1.msra.mxu0 %v31
    %164 = vmatprep.subr.mxu0 0.0
    %165 = vmatpush1.msra.mxu0 0.0
    %166 = vmatprep.subr.mxu0 0.0
    %167 = vmatpush1.msra.mxu0 0.0
    %168 = vmatprep.subr.mxu0 0.0
    %169 = vmatpush1.msra.mxu0 0.0
    %170 = vmatprep.subr.mxu0 0.0
    %171 = vmatpush1.msra.mxu0 0.0
    %172 = vmatprep.subr.mxu0 0.0
    %173 = vmatpush1.msra.mxu0 0.0
    %174 = vmatprep.subr.mxu0 0.0
    %175 = vmatpush1.msra.mxu0 0.0
    %176 = vmatprep.subr.mxu0 0.0
    %177 = vmatpush1.msra.mxu0 0.0
    %178 = vmatprep.subr.mxu0 0.0
    %179 = vmatpush1.msra.mxu0 0.0
    %180 = vmatprep.subr.mxu0 0.0
    %181 = vmatpush1.msra.mxu0 0.0
    %182 = vmatprep.subr.mxu0 0.0
    %183 = vmatpush1.msra.mxu0 0.0
    %184 = vmatprep.subr.mxu0 0.0
    %185 = vmatpush1.msra.mxu0 0.0
    %186 = vmatprep.subr.mxu0 0.0
    %187 = vmatpush1.msra.mxu0 0.0
    %188 = vmatprep.subr.mxu0 0.0
    %189 = vmatpush1.msra.mxu0 0.0
    %190 = vmatprep.subr.mxu0 0.0
    %191 = vmatpush1.msra.mxu0 0.0
    %192 = vmatprep.subr.mxu0 0.0
    %193 = vmatpush1.msra.mxu0 0.0
    %194 = vmatprep.subr.mxu0 0.0
    %195 = vmatpush1.msra.mxu0 0.0
    %196 = vmatprep.subr.mxu0 0.0
    %197 = vmatpush1.msra.mxu0 0.0
    %198 = vmatprep.subr.mxu0 0.0
    %199 = vmatpush1.msra.mxu0 0.0
    %200 = vmatprep.subr.mxu0 0.0
    %201 = vmatpush1.msra.mxu0 0.0
    %202 = vmatprep.subr.mxu0 0.0
    %203 = vmatpush1.msra.mxu0 0.0
    %204 = vmatprep.subr.mxu0 0.0
    %205 = vmatpush1.msra.mxu0 0.0
    %206 = vmatprep.subr.mxu0 0.0
    %207 = vmatpush1.msra.mxu0 0.0
    %208 = vmatprep.subr.mxu0 0.0
    %209 = vmatpush1.msra.mxu0 0.0
    %210 = vmatprep.subr.mxu0 0.0
    %211 = vmatpush1.msra.mxu0 0.0
    %212 = vmatprep.subr.mxu0 0.0
    %213 = vmatpush1.msra.mxu0 0.0
    %214 = vmatprep.subr.mxu0 0.0
    %215 = vmatpush1.msra.mxu0 0.0
    %216 = vmatprep.subr.mxu0 0.0
    %217 = vmatpush1.msra.mxu0 0.0
    %218 = vmatprep.subr.mxu0 0.0
    %219 = vmatpush1.msra.mxu0 0.0
    %220 = vmatprep.mubr.f32.mxu0 0.0
    %221 = vmatmul.mubr.f32.gmra.mrb[0].mxu0 %v154
    %v222 = vpop.f32.mrb[0].mxu0
    %v223 = vadd.f32 0.0, %v222
    %v224 = vpop.f32.mrb[0].mxu0
    %225 = vdwg.mxu0
    %v227 = vrot.slane %v223, 7
    %v229 = vadd.f32 %v47, %v227
    %v230 = vmul.f32 %v229, %v53
    %v231 = vtanh.pop %v230
    %v232 = vmul.f32 %v231, 0.5
    %v233 = vadd.f32 %v232, 0.5
    %v234 = vsel %vm52, %v231, %v233
    %v236 = vrot.slane %v144, 7
    %v238 = vmul.f32 %v234, %v236
    %240 = vrot.lane.b32.xlu0 %v234, 64
    %v241 = vpop.permute.xlu0 %240
    %v243 = vmul.f32 %v234, %v241
    %245 = vrot.lane.b32.xlu0 %v243, 32
    %v246 = vpop.permute.xlu0 %245
    %v248 = vadd.f32 %v238, %v246
    %v249 = vtanh.pop %v248
    %251 = vrot.lane.b32.xlu0 %v249, 64
    %v252 = vpop.permute.xlu0 %251
    %v254 = vmul.f32 %v234, %v252
    %v256 = vrot.slane %v254, 1
    %257 = vrot.lane.b32.xlu0 %v256, 32
    %v258 = vpop.permute.xlu0 %257
    %v259 = vsel %vm54, %v258, 0
    %261 = vmatprep.subr.mxu0 0.0
    %262 = vmatpush1.msra.mxu0 %v28
    %263 = vmatprep.subr.mxu0 0.0
    %264 = vmatpush1.msra.mxu0 %v29
    %265 = vmatprep.subr.mxu0 0.0
    %266 = vmatpush1.msra.mxu0 %v30
    %267 = vmatprep.subr.mxu0 0.0
    %268 = vmatpush1.msra.mxu0 %v31
    %269 = vmatprep.subr.mxu0 0.0
    %270 = vmatpush1.msra.mxu0 0.0
    %271 = vmatprep.subr.mxu0 0.0
    %272 = vmatpush1.msra.mxu0 0.0
    %273 = vmatprep.subr.mxu0 0.0
    %274 = vmatpush1.msra.mxu0 0.0
    %275 = vmatprep.subr.mxu0 0.0
    %276 = vmatpush1.msra.mxu0 0.0
    %277 = vmatprep.subr.mxu0 0.0
    %278 = vmatpush1.msra.mxu0 0.0
    %279 = vmatprep.subr.mxu0 0.0
    %280 = vmatpush1.msra.mxu0 0.0
    %281 = vmatprep.subr.mxu0 0.0
    %282 = vmatpush1.msra.mxu0 0.0
    %283 = vmatprep.subr.mxu0 0.0
    %284 = vmatpush1.msra.mxu0 0.0
    %285 = vmatprep.subr.mxu0 0.0
    %286 = vmatpush1.msra.mxu0 0.0
    %287 = vmatprep.subr.mxu0 0.0
    %288 = vmatpush1.msra.mxu0 0.0
    %289 = vmatprep.subr.mxu0 0.0
    %290 = vmatpush1.msra.mxu0 0.0
    %291 = vmatprep.subr.mxu0 0.0
    %292 = vmatpush1.msra.mxu0 0.0
    %293 = vmatprep.subr.mxu0 0.0
    %294 = vmatpush1.msra.mxu0 0.0
    %295 = vmatprep.subr.mxu0 0.0
    %296 = vmatpush1.msra.mxu0 0.0
    %297 = vmatprep.subr.mxu0 0.0
    %298 = vmatpush1.msra.mxu0 0.0
    %299 = vmatprep.subr.mxu0 0.0
    %300 = vmatpush1.msra.mxu0 0.0
    %301 = vmatprep.subr.mxu0 0.0
    %302 = vmatpush1.msra.mxu0 0.0
    %303 = vmatprep.subr.mxu0 0.0
    %304 = vmatpush1.msra.mxu0 0.0
    %305 = vmatprep.subr.mxu0 0.0
    %306 = vmatpush1.msra.mxu0 0.0
    %307 = vmatprep.subr.mxu0 0.0
    %308 = vmatpush1.msra.mxu0 0.0
    %309 = vmatprep.subr.mxu0 0.0
    %310 = vmatpush1.msra.mxu0 0.0
    %311 = vmatprep.subr.mxu0 0.0
    %312 = vmatpush1.msra.mxu0 0.0
    %313 = vmatprep.subr.mxu0 0.0
    %314 = vmatpush1.msra.mxu0 0.0
    %315 = vmatprep.subr.mxu0 0.0
    %316 = vmatpush1.msra.mxu0 0.0
    %317 = vmatprep.subr.mxu0 0.0
    %318 = vmatpush1.msra.mxu0 0.0
    %319 = vmatprep.subr.mxu0 0.0
    %320 = vmatpush1.msra.mxu0 0.0
    %321 = vmatprep.subr.mxu0 0.0
    %322 = vmatpush1.msra.mxu0 0.0
    %323 = vmatprep.subr.mxu0 0.0
    %324 = vmatpush1.msra.mxu0 0.0
    %325 = vmatprep.mubr.f32.mxu0 0.0
    %326 = vmatmul.mubr.f32.gmra.mrb[0].mxu0 %v259
    %v327 = vpop.f32.mrb[0].mxu0
    %v328 = vadd.f32 0.0, %v327
    %v329 = vpop.f32.mrb[0].mxu0
    %330 = vdwg.mxu0
    %v332 = vrot.slane %v328, 6
    %v334 = vadd.f32 %v47, %v332
    %v335 = vmul.f32 %v334, %v53
    %v336 = vtanh.pop %v335
    %v337 = vmul.f32 %v336, 0.5
    %v338 = vadd.f32 %v337, 0.5
    %v339 = vsel %vm52, %v336, %v338
    %v341 = vrot.slane %v248, 7
    %v343 = vmul.f32 %v339, %v341
    %345 = vrot.lane.b32.xlu0 %v339, 64
    %v346 = vpop.permute.xlu0 %345
    %v348 = vmul.f32 %v339, %v346
    %350 = vrot.lane.b32.xlu0 %v348, 32
    %v351 = vpop.permute.xlu0 %350
    %v353 = vadd.f32 %v343, %v351
    %v354 = vtanh.pop %v353
    %356 = vrot.lane.b32.xlu0 %v354, 64
    %v357 = vpop.permute.xlu0 %356
    %v359 = vmul.f32 %v339, %v357
    %v361 = vrot.slane %v359, 2
    %362 = vrot.lane.b32.xlu0 %v361, 32
    %v363 = vpop.permute.xlu0 %362
    %v364 = vsel %vm54, %v363, 0
    %366 = vmatprep.subr.mxu0 0.0
    %367 = vmatpush1.msra.mxu0 %v28
    %368 = vmatprep.subr.mxu0 0.0
    %369 = vmatpush1.msra.mxu0 %v29
    %370 = vmatprep.subr.mxu0 0.0
    %371 = vmatpush1.msra.mxu0 %v30
    %372 = vmatprep.subr.mxu0 0.0
    %373 = vmatpush1.msra.mxu0 %v31
    %374 = vmatprep.subr.mxu0 0.0
    %375 = vmatpush1.msra.mxu0 0.0
    %376 = vmatprep.subr.mxu0 0.0
    %377 = vmatpush1.msra.mxu0 0.0
    %378 = vmatprep.subr.mxu0 0.0
    %379 = vmatpush1.msra.mxu0 0.0
    %380 = vmatprep.subr.mxu0 0.0
    %381 = vmatpush1.msra.mxu0 0.0
    %382 = vmatprep.subr.mxu0 0.0
    %383 = vmatpush1.msra.mxu0 0.0
    %384 = vmatprep.subr.mxu0 0.0
    %385 = vmatpush1.msra.mxu0 0.0
    %386 = vmatprep.subr.mxu0 0.0
    %387 = vmatpush1.msra.mxu0 0.0
    %388 = vmatprep.subr.mxu0 0.0
    %389 = vmatpush1.msra.mxu0 0.0
    %390 = vmatprep.subr.mxu0 0.0
    %391 = vmatpush1.msra.mxu0 0.0
    %392 = vmatprep.subr.mxu0 0.0
    %393 = vmatpush1.msra.mxu0 0.0
    %394 = vmatprep.subr.mxu0 0.0
    %395 = vmatpush1.msra.mxu0 0.0
    %396 = vmatprep.subr.mxu0 0.0
    %397 = vmatpush1.msra.mxu0 0.0
    %398 = vmatprep.subr.mxu0 0.0
    %399 = vmatpush1.msra.mxu0 0.0
    %400 = vmatprep.subr.mxu0 0.0
    %401 = vmatpush1.msra.mxu0 0.0
    %402 = vmatprep.subr.mxu0 0.0
    %403 = vmatpush1.msra.mxu0 0.0
    %404 = vmatprep.subr.mxu0 0.0
    %405 = vmatpush1.msra.mxu0 0.0
    %406 = vmatprep.subr.mxu0 0.0
    %407 = vmatpush1.msra.mxu0 0.0
    %408 = vmatprep.subr.mxu0 0.0
    %409 = vmatpush1.msra.mxu0 0.0
    %410 = vmatprep.subr.mxu0 0.0
    %411 = vmatpush1.msra.mxu0 0.0
    %412 = vmatprep.subr.mxu0 0.0
    %413 = vmatpush1.msra.mxu0 0.0
    %414 = vmatprep.subr.mxu0 0.0
    %415 = vmatpush1.msra.mxu0 0.0
    %416 = vmatprep.subr.mxu0 0.0
    %417 = vmatpush1.msra.mxu0 0.0
    %418 = vmatprep.subr.mxu0 0.0
    %419 = vmatpush1.msra.mxu0 0.0
    %420 = vmatprep.subr.mxu0 0.0
    %421 = vmatpush1.msra.mxu0 0.0
    %422 = vmatprep.subr.mxu0 0.0
    %423 = vmatpush1.msra.mxu0 0.0
    %424 = vmatprep.subr.mxu0 0.0
    %425 = vmatpush1.msra.mxu0 0.0
    %426 = vmatprep.subr.mxu0 0.0
    %427 = vmatpush1.msra.mxu0 0.0
    %428 = vmatprep.subr.mxu0 0.0
    %429 = vmatpush1.msra.mxu0 0.0
    %430 = vmatprep.mubr.f32.mxu0 0.0
    %431 = vmatmul.mubr.f32.gmra.mrb[0].mxu0 %v364
    %v432 = vpop.f32.mrb[0].mxu0
    %v433 = vadd.f32 0.0, %v432
    %v434 = vpop.f32.mrb[0].mxu0
    %435 = vdwg.mxu0
    %v437 = vrot.slane %v433, 5
    %v439 = vadd.f32 %v47, %v437
    %v440 = vmul.f32 %v439, %v53
    %v441 = vtanh.pop %v440
    %v442 = vmul.f32 %v441, 0.5
    %v443 = vadd.f32 %v442, 0.5
    %v444 = vsel %vm52, %v441, %v443
    %v446 = vrot.slane %v353, 7
    %v448 = vmul.f32 %v444, %v446
    %450 = vrot.lane.b32.xlu0 %v444, 64
    %v451 = vpop.permute.xlu0 %450
    %v453 = vmul.f32 %v444, %v451
    %455 = vrot.lane.b32.xlu0 %v453, 32
    %v456 = vpop.permute.xlu0 %455
    %v458 = vadd.f32 %v448, %v456
    %v459 = vtanh.pop %v458
    %461 = vrot.lane.b32.xlu0 %v459, 64
    %v462 = vpop.permute.xlu0 %461
    %v464 = vmul.f32 %v444, %v462
    %v466 = vrot.slane %v464, 3
    %467 = vrot.lane.b32.xlu0 %v466, 32
    %v468 = vpop.permute.xlu0 %467
    %v469 = vsel %vm54, %v468, 0
    %471 = vmatprep.subr.mxu0 0.0
    %472 = vmatpush1.msra.mxu0 %v28
    %473 = vmatprep.subr.mxu0 0.0
    %474 = vmatpush1.msra.mxu0 %v29
    %475 = vmatprep.subr.mxu0 0.0
    %476 = vmatpush1.msra.mxu0 %v30
    %477 = vmatprep.subr.mxu0 0.0
    %478 = vmatpush1.msra.mxu0 %v31
    %479 = vmatprep.subr.mxu0 0.0
    %480 = vmatpush1.msra.mxu0 0.0
    %481 = vmatprep.subr.mxu0 0.0
    %482 = vmatpush1.msra.mxu0 0.0
    %483 = vmatprep.subr.mxu0 0.0
    %484 = vmatpush1.msra.mxu0 0.0
    %485 = vmatprep.subr.mxu0 0.0
    %486 = vmatpush1.msra.mxu0 0.0
    %487 = vmatprep.subr.mxu0 0.0
    %488 = vmatpush1.msra.mxu0 0.0
    %489 = vmatprep.subr.mxu0 0.0
    %490 = vmatpush1.msra.mxu0 0.0
    %491 = vmatprep.subr.mxu0 0.0
    %492 = vmatpush1.msra.mxu0 0.0
    %493 = vmatprep.subr.mxu0 0.0
    %494 = vmatpush1.msra.mxu0 0.0
    %495 = vmatprep.subr.mxu0 0.0
    %496 = vmatpush1.msra.mxu0 0.0
    %497 = vmatprep.subr.mxu0 0.0
    %498 = vmatpush1.msra.mxu0 0.0
    %499 = vmatprep.subr.mxu0 0.0
    %500 = vmatpush1.msra.mxu0 0.0
    %501 = vmatprep.subr.mxu0 0.0
    %502 = vmatpush1.msra.mxu0 0.0
    %503 = vmatprep.subr.mxu0 0.0
    %504 = vmatpush1.msra.mxu0 0.0
    %505 = vmatprep.subr.mxu0 0.0
    %506 = vmatpush1.msra.mxu0 0.0
    %507 = vmatprep.subr.mxu0 0.0
    %508 = vmatpush1.msra.mxu0 0.0
    %509 = vmatprep.subr.mxu0 0.0
    %510 = vmatpush1.msra.mxu0 0.0
    %511 = vmatprep.subr.mxu0 0.0
    %512 = vmatpush1.msra.mxu0 0.0
    %513 = vmatprep.subr.mxu0 0.0
    %514 = vmatpush1.msra.mxu0 0.0
    %515 = vmatprep.subr.mxu0 0.0
    %516 = vmatpush1.msra.mxu0 0.0
    %517 = vmatprep.subr.mxu0 0.0
    %518 = vmatpush1.msra.mxu0 0.0
    %519 = vmatprep.subr.mxu0 0.0
    %520 = vmatpush1.msra.mxu0 0.0
    %521 = vmatprep.subr.mxu0 0.0
    %522 = vmatpush1.msra.mxu0 0.0
    %523 = vmatprep.subr.mxu0 0.0
    %524 = vmatpush1.msra.mxu0 0.0
    %525 = vmatprep.subr.mxu0 0.0
    %526 = vmatpush1.msra.mxu0 0.0
    %527 = vmatprep.subr.mxu0 0.0
    %528 = vmatpush1.msra.mxu0 0.0
    %529 = vmatprep.subr.mxu0 0.0
    %530 = vmatpush1.msra.mxu0 0.0
    %531 = vmatprep.subr.mxu0 0.0
    %532 = vmatpush1.msra.mxu0 0.0
    %533 = vmatprep.subr.mxu0 0.0
    %534 = vmatpush1.msra.mxu0 0.0
    %535 = vmatprep.mubr.f32.mxu0 0.0
    %536 = vmatmul.mubr.f32.gmra.mrb[0].mxu0 %v469
    %v537 = vpop.f32.mrb[0].mxu0
    %v538 = vadd.f32 0.0, %v537
    %v539 = vpop.f32.mrb[0].mxu0
    %540 = vdwg.mxu0
    %v542 = vrot.slane %v538, 4
    %v544 = vadd.f32 %v47, %v542
    %v545 = vmul.f32 %v544, %v53
    %v546 = vtanh.pop %v545
    %v547 = vmul.f32 %v546, 0.5
    %v548 = vadd.f32 %v547, 0.5
    %v549 = vsel %vm52, %v546, %v548
    %v551 = vrot.slane %v458, 7
    %v553 = vmul.f32 %v549, %v551
    %555 = vrot.lane.b32.xlu0 %v549, 64
    %v556 = vpop.permute.xlu0 %555
    %v558 = vmul.f32 %v549, %v556
    %560 = vrot.lane.b32.xlu0 %v558, 32
    %v561 = vpop.permute.xlu0 %560
    %v563 = vadd.f32 %v553, %v561
    %v564 = vtanh.pop %v563
    %566 = vrot.lane.b32.xlu0 %v564, 64
    %v567 = vpop.permute.xlu0 %566
    %v569 = vmul.f32 %v549, %v567
    %v571 = vrot.slane %v569, 4
    %572 = vrot.lane.b32.xlu0 %v571, 32
    %v573 = vpop.permute.xlu0 %572
    %v574 = vsel %vm54, %v573, 0
    %576 = vmatprep.subr.mxu0 0.0
    %577 = vmatpush1.msra.mxu0 %v28
    %578 = vmatprep.subr.mxu0 0.0
    %579 = vmatpush1.msra.mxu0 %v29
    %580 = vmatprep.subr.mxu0 0.0
    %581 = vmatpush1.msra.mxu0 %v30
    %582 = vmatprep.subr.mxu0 0.0
    %583 = vmatpush1.msra.mxu0 %v31
    %584 = vmatprep.subr.mxu0 0.0
    %585 = vmatpush1.msra.mxu0 0.0
    %586 = vmatprep.subr.mxu0 0.0
    %587 = vmatpush1.msra.mxu0 0.0
    %588 = vmatprep.subr.mxu0 0.0
    %589 = vmatpush1.msra.mxu0 0.0
    %590 = vmatprep.subr.mxu0 0.0
    %591 = vmatpush1.msra.mxu0 0.0
    %592 = vmatprep.subr.mxu0 0.0
    %593 = vmatpush1.msra.mxu0 0.0
    %594 = vmatprep.subr.mxu0 0.0
    %595 = vmatpush1.msra.mxu0 0.0
    %596 = vmatprep.subr.mxu0 0.0
    %597 = vmatpush1.msra.mxu0 0.0
    %598 = vmatprep.subr.mxu0 0.0
    %599 = vmatpush1.msra.mxu0 0.0
    %600 = vmatprep.subr.mxu0 0.0
    %601 = vmatpush1.msra.mxu0 0.0
    %602 = vmatprep.subr.mxu0 0.0
    %603 = vmatpush1.msra.mxu0 0.0
    %604 = vmatprep.subr.mxu0 0.0
    %605 = vmatpush1.msra.mxu0 0.0
    %606 = vmatprep.subr.mxu0 0.0
    %607 = vmatpush1.msra.mxu0 0.0
    %608 = vmatprep.subr.mxu0 0.0
    %609 = vmatpush1.msra.mxu0 0.0
    %610 = vmatprep.subr.mxu0 0.0
    %611 = vmatpush1.msra.mxu0 0.0
    %612 = vmatprep.subr.mxu0 0.0
    %613 = vmatpush1.msra.mxu0 0.0
    %614 = vmatprep.subr.mxu0 0.0
    %615 = vmatpush1.msra.mxu0 0.0
    %616 = vmatprep.subr.mxu0 0.0
    %617 = vmatpush1.msra.mxu0 0.0
    %618 = vmatprep.subr.mxu0 0.0
    %619 = vmatpush1.msra.mxu0 0.0
    %620 = vmatprep.subr.mxu0 0.0
    %621 = vmatpush1.msra.mxu0 0.0
    %622 = vmatprep.subr.mxu0 0.0
    %623 = vmatpush1.msra.mxu0 0.0
    %624 = vmatprep.subr.mxu0 0.0
    %625 = vmatpush1.msra.mxu0 0.0
    %626 = vmatprep.subr.mxu0 0.0
    %627 = vmatpush1.msra.mxu0 0.0
    %628 = vmatprep.subr.mxu0 0.0
    %629 = vmatpush1.msra.mxu0 0.0
    %630 = vmatprep.subr.mxu0 0.0
    %631 = vmatpush1.msra.mxu0 0.0
    %632 = vmatprep.subr.mxu0 0.0
    %633 = vmatpush1.msra.mxu0 0.0
    %634 = vmatprep.subr.mxu0 0.0
    %635 = vmatpush1.msra.mxu0 0.0
    %636 = vmatprep.subr.mxu0 0.0
    %637 = vmatpush1.msra.mxu0 0.0
    %638 = vmatprep.subr.mxu0 0.0
    %639 = vmatpush1.msra.mxu0 0.0
    %640 = vmatprep.mubr.f32.mxu0 0.0
    %641 = vmatmul.mubr.f32.gmra.mrb[0].mxu0 %v574
    %v642 = vpop.f32.mrb[0].mxu0
    %v643 = vadd.f32 0.0, %v642
    %v644 = vpop.f32.mrb[0].mxu0
    %645 = vdwg.mxu0
    %v647 = vrot.slane %v643, 3
    %v649 = vadd.f32 %v47, %v647
    %v650 = vmul.f32 %v649, %v53
    %v651 = vtanh.pop %v650
    %v652 = vmul.f32 %v651, 0.5
    %v653 = vadd.f32 %v652, 0.5
    %v654 = vsel %vm52, %v651, %v653
    %v656 = vrot.slane %v563, 7
    %v658 = vmul.f32 %v654, %v656
    %660 = vrot.lane.b32.xlu0 %v654, 64
    %v661 = vpop.permute.xlu0 %660
    %v663 = vmul.f32 %v654, %v661
    %665 = vrot.lane.b32.xlu0 %v663, 32
    %v666 = vpop.permute.xlu0 %665
    %v668 = vadd.f32 %v658, %v666
    %v669 = vtanh.pop %v668
    %671 = vrot.lane.b32.xlu0 %v669, 64
    %v672 = vpop.permute.xlu0 %671
    %v674 = vmul.f32 %v654, %v672
    %v676 = vrot.slane %v674, 5
    %677 = vrot.lane.b32.xlu0 %v676, 32
    %v678 = vpop.permute.xlu0 %677
    %v679 = vsel %vm54, %v678, 0
    %681 = vmatprep.subr.mxu0 0.0
    %682 = vmatpush1.msra.mxu0 %v28
    %683 = vmatprep.subr.mxu0 0.0
    %684 = vmatpush1.msra.mxu0 %v29
    %685 = vmatprep.subr.mxu0 0.0
    %686 = vmatpush1.msra.mxu0 %v30
    %687 = vmatprep.subr.mxu0 0.0
    %688 = vmatpush1.msra.mxu0 %v31
    %689 = vmatprep.subr.mxu0 0.0
    %690 = vmatpush1.msra.mxu0 0.0
    %691 = vmatprep.subr.mxu0 0.0
    %692 = vmatpush1.msra.mxu0 0.0
    %693 = vmatprep.subr.mxu0 0.0
    %694 = vmatpush1.msra.mxu0 0.0
    %695 = vmatprep.subr.mxu0 0.0
    %696 = vmatpush1.msra.mxu0 0.0
    %697 = vmatprep.subr.mxu0 0.0
    %698 = vmatpush1.msra.mxu0 0.0
    %699 = vmatprep.subr.mxu0 0.0
    %700 = vmatpush1.msra.mxu0 0.0
    %701 = vmatprep.subr.mxu0 0.0
    %702 = vmatpush1.msra.mxu0 0.0
    %703 = vmatprep.subr.mxu0 0.0
    %704 = vmatpush1.msra.mxu0 0.0
    %705 = vmatprep.subr.mxu0 0.0
    %706 = vmatpush1.msra.mxu0 0.0
    %707 = vmatprep.subr.mxu0 0.0
    %708 = vmatpush1.msra.mxu0 0.0
    %709 = vmatprep.subr.mxu0 0.0
    %710 = vmatpush1.msra.mxu0 0.0
    %711 = vmatprep.subr.mxu0 0.0
    %712 = vmatpush1.msra.mxu0 0.0
    %713 = vmatprep.subr.mxu0 0.0
    %714 = vmatpush1.msra.mxu0 0.0
    %715 = vmatprep.subr.mxu0 0.0
    %716 = vmatpush1.msra.mxu0 0.0
    %717 = vmatprep.subr.mxu0 0.0
    %718 = vmatpush1.msra.mxu0 0.0
    %719 = vmatprep.subr.mxu0 0.0
    %720 = vmatpush1.msra.mxu0 0.0
    %721 = vmatprep.subr.mxu0 0.0
    %722 = vmatpush1.msra.mxu0 0.0
    %723 = vmatprep.subr.mxu0 0.0
    %724 = vmatpush1.msra.mxu0 0.0
    %725 = vmatprep.subr.mxu0 0.0
    %726 = vmatpush1.msra.mxu0 0.0
    %727 = vmatprep.subr.mxu0 0.0
    %728 = vmatpush1.msra.mxu0 0.0
    %729 = vmatprep.subr.mxu0 0.0
    %730 = vmatpush1.msra.mxu0 0.0
    %731 = vmatprep.subr.mxu0 0.0
    %732 = vmatpush1.msra.mxu0 0.0
    %733 = vmatprep.subr.mxu0 0.0
    %734 = vmatpush1.msra.mxu0 0.0
    %735 = vmatprep.subr.mxu0 0.0
    %736 = vmatpush1.msra.mxu0 0.0
    %737 = vmatprep.subr.mxu0 0.0
    %738 = vmatpush1.msra.mxu0 0.0
    %739 = vmatprep.subr.mxu0 0.0
    %740 = vmatpush1.msra.mxu0 0.0
    %741 = vmatprep.subr.mxu0 0.0
    %742 = vmatpush1.msra.mxu0 0.0
    %743 = vmatprep.subr.mxu0 0.0
    %744 = vmatpush1.msra.mxu0 0.0
    %745 = vmatprep.mubr.f32.mxu0 0.0
    %746 = vmatmul.mubr.f32.gmra.mrb[0].mxu0 %v679
    %v747 = vpop.f32.mrb[0].mxu0
    %v748 = vadd.f32 0.0, %v747
    %v749 = vpop.f32.mrb[0].mxu0
    %750 = vdwg.mxu0
    %v752 = vrot.slane %v748, 2
    %v754 = vadd.f32 %v47, %v752
    %v755 = vmul.f32 %v754, %v53
    %v756 = vtanh.pop %v755
    %v757 = vmul.f32 %v756, 0.5
    %v758 = vadd.f32 %v757, 0.5
    %v759 = vsel %vm52, %v756, %v758
    %v761 = vrot.slane %v668, 7
    %v763 = vmul.f32 %v759, %v761
    %765 = vrot.lane.b32.xlu0 %v759, 64
    %v766 = vpop.permute.xlu0 %765
    %v768 = vmul.f32 %v759, %v766
    %770 = vrot.lane.b32.xlu0 %v768, 32
    %v771 = vpop.permute.xlu0 %770
    %v773 = vadd.f32 %v763, %v771
    %v774 = vtanh.pop %v773
    %776 = vrot.lane.b32.xlu0 %v774, 64
    %v777 = vpop.permute.xlu0 %776
    %v779 = vmul.f32 %v759, %v777
    %v781 = vrot.slane %v779, 6
    %782 = vrot.lane.b32.xlu0 %v781, 32
    %v783 = vpop.permute.xlu0 %782
    %v784 = vsel %vm54, %v783, 0
    %786 = vmatprep.subr.mxu0 0.0
    %787 = vmatpush1.msra.mxu0 %v28
    %788 = vmatprep.subr.mxu0 0.0
    %789 = vmatpush1.msra.mxu0 %v29
    %790 = vmatprep.subr.mxu0 0.0
    %791 = vmatpush1.msra.mxu0 %v30
    %792 = vmatprep.subr.mxu0 0.0
    %793 = vmatpush1.msra.mxu0 %v31
    %794 = vmatprep.subr.mxu0 0.0
    %795 = vmatpush1.msra.mxu0 0.0
    %796 = vmatprep.subr.mxu0 0.0
    %797 = vmatpush1.msra.mxu0 0.0
    %798 = vmatprep.subr.mxu0 0.0
    %799 = vmatpush1.msra.mxu0 0.0
    %800 = vmatprep.subr.mxu0 0.0
    %801 = vmatpush1.msra.mxu0 0.0
    %802 = vmatprep.subr.mxu0 0.0
    %803 = vmatpush1.msra.mxu0 0.0
    %804 = vmatprep.subr.mxu0 0.0
    %805 = vmatpush1.msra.mxu0 0.0
    %806 = vmatprep.subr.mxu0 0.0
    %807 = vmatpush1.msra.mxu0 0.0
    %808 = vmatprep.subr.mxu0 0.0
    %809 = vmatpush1.msra.mxu0 0.0
    %810 = vmatprep.subr.mxu0 0.0
    %811 = vmatpush1.msra.mxu0 0.0
    %812 = vmatprep.subr.mxu0 0.0
    %813 = vmatpush1.msra.mxu0 0.0
    %814 = vmatprep.subr.mxu0 0.0
    %815 = vmatpush1.msra.mxu0 0.0
    %816 = vmatprep.subr.mxu0 0.0
    %817 = vmatpush1.msra.mxu0 0.0
    %818 = vmatprep.subr.mxu0 0.0
    %819 = vmatpush1.msra.mxu0 0.0
    %820 = vmatprep.subr.mxu0 0.0
    %821 = vmatpush1.msra.mxu0 0.0
    %822 = vmatprep.subr.mxu0 0.0
    %823 = vmatpush1.msra.mxu0 0.0
    %824 = vmatprep.subr.mxu0 0.0
    %825 = vmatpush1.msra.mxu0 0.0
    %826 = vmatprep.subr.mxu0 0.0
    %827 = vmatpush1.msra.mxu0 0.0
    %828 = vmatprep.subr.mxu0 0.0
    %829 = vmatpush1.msra.mxu0 0.0
    %830 = vmatprep.subr.mxu0 0.0
    %831 = vmatpush1.msra.mxu0 0.0
    %832 = vmatprep.subr.mxu0 0.0
    %833 = vmatpush1.msra.mxu0 0.0
    %834 = vmatprep.subr.mxu0 0.0
    %835 = vmatpush1.msra.mxu0 0.0
    %836 = vmatprep.subr.mxu0 0.0
    %837 = vmatpush1.msra.mxu0 0.0
    %838 = vmatprep.subr.mxu0 0.0
    %839 = vmatpush1.msra.mxu0 0.0
    %840 = vmatprep.subr.mxu0 0.0
    %841 = vmatpush1.msra.mxu0 0.0
    %842 = vmatprep.subr.mxu0 0.0
    %843 = vmatpush1.msra.mxu0 0.0
    %844 = vmatprep.subr.mxu0 0.0
    %845 = vmatpush1.msra.mxu0 0.0
    %846 = vmatprep.subr.mxu0 0.0
    %847 = vmatpush1.msra.mxu0 0.0
    %848 = vmatprep.subr.mxu0 0.0
    %849 = vmatpush1.msra.mxu0 0.0
    %850 = vmatprep.mubr.f32.mxu0 0.0
    %851 = vmatmul.mubr.f32.gmra.mrb[0].mxu0 %v784
    %v852 = vpop.f32.mrb[0].mxu0
    %v853 = vadd.f32 0.0, %v852
    %v854 = vpop.f32.mrb[0].mxu0
    %855 = vdwg.mxu0
    %v857 = vrot.slane %v853, 1
    %v859 = vadd.f32 %v47, %v857
    %v860 = vmul.f32 %v859, %v53
    %v861 = vtanh.pop %v860
    %v862 = vmul.f32 %v861, 0.5
    %v863 = vadd.f32 %v862, 0.5
    %v864 = vsel %vm52, %v861, %v863
    %v866 = vrot.slane %v773, 7
    %v868 = vmul.f32 %v864, %v866
    %870 = vrot.lane.b32.xlu0 %v864, 64
    %v871 = vpop.permute.xlu0 %870
    %v873 = vmul.f32 %v864, %v871
    %875 = vrot.lane.b32.xlu0 %v873, 32
    %v876 = vpop.permute.xlu0 %875
    %v878 = vadd.f32 %v868, %v876
    %v879 = vtanh.pop %v878
    %881 = vrot.lane.b32.xlu0 %v879, 64
    %v882 = vpop.permute.xlu0 %881
    %v884 = vmul.f32 %v864, %v882
    %v885 = vld [vmem:[#allocation2 + $0x22] sm:$0x1]
    %v886 = vld [vmem:[#allocation2 + $0x23] sm:$0x1]
    %v888 = vrot.slane %v885, 1
    %889 = vrot.lane.b32.xlu0 %v888, 96
    %v890 = vpop.permute.xlu0 %889
    %v892 = vmul.f32 %v884, %v890
    %894 = vrot.lane.b32.xlu0 %v892, 32
    %v895 = vpop.permute.xlu0 %894
    %vm897 = vcmask 261127
    %v898 = vsel %vm897, %v895, 0.0
    %899 = vadd.xlane.f32.xlu0 %v898
    %v900 = vpop.xlane.xlu0 %899
    %v902 = vrot.slane %v886, 1
    %v904 = vadd.f32 %v900, %v902
    %vm905 = vcmask 7175
    %906 = vst.msk [vmem:[#allocation5 - $0x7] sm:$0x80] %vm905, %v904
    // Predicated region
    $region14: #{lstm_forward.1} parent=1 // pred_check
      _
    $region15: #{lstm_forward.1} parent=1 // pred_check_branch
      %908 = sbr.rel (0) target = $region17
    $region16: #{lstm_forward.1} parent=1 // pred_region
      %s910 = ssub.s32 16, 16
      %911 = vsyncadd [#allocation4], %s910
      %s913 = sshll.u32 [#allocation5], 4
      %s914 = int_to_ptr.vmem [resolvable:$true] %s913
      %916 = dma.vmem_to_hbm [thread:$0]  %s914, 16, %s2, [#allocation4]
    $region17: #{lstm_forward.1} parent=1 // pred_fallthru
      _
    // Predicated region
    $region18: #{lstm_forward.1} parent=1 // pred_check
      _
    $region19: #{lstm_forward.1} parent=1 // pred_check_branch
      %918 = sbr.rel (0) target = $region21
    $region20: #{lstm_forward.1} parent=1 // pred_region
      %919 = dma.done [#allocation4], 16
    $region21: #{lstm_forward.1} parent=1 // pred_fallthru
      _
    %920 = vsyncpa [#allocation3], 1
    %921 = vsyncpa [#allocation4], 1

</llo_original>
